<compile_context>
chip_gen: v7x
topology: tpu7x:2x2x1
jax: 0.10.0
libtpu: 0.0.40
codegen_flags: <defaults>
</compile_context>

<pallas_src>
import functools

import jax
import jax.numpy as jnp
from jax.experimental import pallas as pl
from jax.experimental.pallas import tpu as pltpu


F_PAD = 128  # lane-dense feature width (vreg lane count)


# ----------------------------------------------------------------------------
# Fused 3-layer HeteroGCN kernel (runs once; no grid)
# ----------------------------------------------------------------------------
def _fused_hetero_gcn_kernel(a_ref, x_ref, w1_ref, w2_hbm, w3_hbm,
                             b1_ref, b2_ref, b3_ref, o_ref,
                             w2_vmem, w3_vmem, dma_sems, *, num_rel, n_nodes):
    # a_ref    : [N, K_PAD]        bf16  dst-major concat of normalized adjacencies,
    #                                    K zero-padded from R*N up to a mult. of 128
    # x_ref    : [N, F_PAD]        bf16  zero-padded input features
    # w1_ref   : [F_PAD, R*F_PAD]  bf16  W_cat for layer 1 (in VMEM)
    # w2_hbm/w3_hbm : same shape, left in HBM (pl.ANY) — DMA'd manually below
    # b*_ref   : [1, F_PAD]        f32   sum over relations of per-relation biases
    # o_ref    : [N, F_PAD]        f32
    # w2_vmem/w3_vmem : VMEM landing buffers; dma_sems : DMA semaphores (2,)

    # Kick off layer-2/3 weight DMA now; hide it behind layer-1 MXU work.
    w2_copy = pltpu.make_async_copy(w2_hbm, w2_vmem, dma_sems.at[0])
    w3_copy = pltpu.make_async_copy(w3_hbm, w3_vmem, dma_sems.at[1])
    w2_copy.start()
    w3_copy.start()

    a_cat = a_ref[...]                                  # [N, K_PAD] bf16
    k_pad = a_cat.shape[1]
    n_zero_rows = k_pad - num_rel * n_nodes

    def layer(h_bf16, w_cat_bf16, b_ref, relu):
        # One wide MXU call:  X @ [W_1 | ... | W_R]  ->  [N, R*F_PAD]
        s = jnp.dot(h_bf16, w_cat_bf16, preferred_element_type=jnp.float32)
        s = s.astype(jnp.bfloat16)
        # Re-stack the relation lane-blocks along rows entirely in registers
        # (no scratch-ref store->load), zero-padding K up to k_pad.
        blocks = [s[:, r * F_PAD:(r + 1) * F_PAD] for r in range(num_rel)]
        if n_zero_rows:
            blocks.append(jnp.zeros((n_zero_rows, F_PAD), jnp.bfloat16))
        slab = jnp.concatenate(blocks, axis=0)          # [K_PAD, F_PAD] bf16
        # Single MXU call:  sum_r Ahat_r @ (X W_r)  ==  A_cat @ slab
        y = jnp.dot(a_cat, slab, preferred_element_type=jnp.float32)
        y = y + b_ref[...]
        return jnp.maximum(y, 0.0) if relu else y

    h = layer(x_ref[...], w1_ref[...], b1_ref, relu=True)
    w2_copy.wait()
    h = layer(h.astype(jnp.bfloat16), w2_vmem[...], b2_ref, relu=True)
    w3_copy.wait()
    o_ref[...] = layer(h.astype(jnp.bfloat16), w3_vmem[...], b3_ref, relu=False)


# ----------------------------------------------------------------------------
# One-time (graph / parameter static) preprocessing — call ONCE, not per forward
# ----------------------------------------------------------------------------
def prepare_graph(a_hat):
    """a_hat: [R, N, N] f32 normalized adjacencies ->
    dst-major concat A_cat[i, r*N + j] = a_hat[r, i, j], K zero-padded to a
    multiple of 128, cast to bf16 (MXU input)."""
    R, N, _ = a_hat.shape
    k = R * N
    k_pad = max(128, ((k + 127) // 128) * 128)
    a_cat = jnp.transpose(a_hat, (1, 0, 2)).reshape(N, k)
    a_cat = jnp.pad(a_cat, ((0, 0), (0, k_pad - k)))
    return a_cat.astype(jnp.bfloat16)


def prepare_params(params):
    """Zero-pad per-relation weights to [F_PAD, F_PAD], concatenate along the
    output dim into W_cat = [F_PAD, R*F_PAD] (bf16), and pre-sum biases over
    relations into [1, F_PAD] f32."""
    R = params["w1"].shape[0]

    def pad_w_cat(w):
        out = jnp.zeros((R, F_PAD, F_PAD), jnp.float32)
        out = out.at[:, : w.shape[1], : w.shape[2]].set(w)
        # [R, F_in, F_out] -> W_cat[i, r*F_PAD + j] = W_r[i, j]
        return jnp.transpose(out, (1, 0, 2)).reshape(F_PAD, R * F_PAD).astype(jnp.bfloat16)

    def pad_b(b):
        out = jnp.zeros((1, F_PAD), jnp.float32)
        return out.at[0, : b.shape[1]].set(b.sum(axis=0))

    return {
        "w1": pad_w_cat(params["w1"]),
        "w2": pad_w_cat(params["w2"]),
        "w3": pad_w_cat(params["w3"]),
        "b1": pad_b(params["b1"]),
        "b2": pad_b(params["b2"]),
        "b3": pad_b(params["b3"]),
    }


# ----------------------------------------------------------------------------
# Per-forward wrapper
# ----------------------------------------------------------------------------
@jax.jit
def _forward_padded(a_cat, x, prep):
    N = a_cat.shape[0]
    R = prep["w1"].shape[1] // F_PAD

    x_pad = jnp.zeros((N, F_PAD), jnp.float32).at[:, : x.shape[1]].set(x)
    x_pad = x_pad.astype(jnp.bfloat16)

    kernel = functools.partial(_fused_hetero_gcn_kernel, num_rel=R, n_nodes=N)
    vmem = pltpu.MemorySpace.VMEM

    return pl.pallas_call(
        kernel,
        out_shape=jax.ShapeDtypeStruct((N, F_PAD), jnp.float32),
        in_specs=[
            pl.BlockSpec(memory_space=vmem),    # a_cat
            pl.BlockSpec(memory_space=vmem),    # x_pad
            pl.BlockSpec(memory_space=vmem),    # w1_cat (needed immediately)
            pl.BlockSpec(memory_space=pl.ANY),  # w2_cat (manual DMA, overlapped)
            pl.BlockSpec(memory_space=pl.ANY),  # w3_cat (manual DMA, overlapped)
            pl.BlockSpec(memory_space=vmem),    # b1
            pl.BlockSpec(memory_space=vmem),    # b2
            pl.BlockSpec(memory_space=vmem),    # b3
        ],
        out_specs=pl.BlockSpec(memory_space=vmem),
        scratch_shapes=[
            pltpu.VMEM((F_PAD, R * F_PAD), jnp.bfloat16),  # w2 landing buffer
            pltpu.VMEM((F_PAD, R * F_PAD), jnp.bfloat16),  # w3 landing buffer
            pltpu.SemaphoreType.DMA((2,)),
        ],
    )(a_cat, x_pad, prep["w1"], prep["w2"], prep["w3"],
      prep["b1"], prep["b2"], prep["b3"])


def hetero_gcn_forward(a_cat, x, prep, num_classes):
    """a_cat: prepare_graph(a_hat), x: [N, F_in] f32, prep: prepare_params(params)."""
    return _forward_padded(a_cat, x, prep)[:, :num_classes]


# ----------------------------------------------------------------------------
# Glue: graph normalization (DGL GraphConv, norm='both')
# ----------------------------------------------------------------------------
def normalize_adjacency(a):
    """a: [R, N, N] with a[r, i, j] = 1 iff edge j -> i for relation r.
    Returns Ahat[r] = D_in^{-1/2} A_r D_out^{-1/2}  (degrees clamped to >= 1)."""
    deg_out = jnp.clip(a.sum(axis=1), 1.0, None)   # [R, N] out-degree of src j
    deg_in = jnp.clip(a.sum(axis=2), 1.0, None)    # [R, N] in-degree of dst i
    return a * jax.lax.rsqrt(deg_in)[:, :, None] * jax.lax.rsqrt(deg_out)[:, None, :]


# ----------------------------------------------------------------------------
# Parameter init (Xavier-uniform weights, small random biases for testing)
# ----------------------------------------------------------------------------
def xavier_uniform(key, shape):
    fan_in, fan_out = shape[-2], shape[-1]
    limit = jnp.sqrt(6.0 / (fan_in + fan_out))
    return jax.random.uniform(key, shape, jnp.float32, -limit, limit)


def init_params(key, num_rel, in_feats, h1_feats, h2_feats, num_classes):
    ks = jax.random.split(key, 6)
    return {
        "w1": xavier_uniform(ks[0], (num_rel, in_feats, h1_feats)),
        "b1": 0.1 * jax.random.normal(ks[1], (num_rel, h1_feats), jnp.float32),
        "w2": xavier_uniform(ks[2], (num_rel, h1_feats, h2_feats)),
        "b2": 0.1 * jax.random.normal(ks[3], (num_rel, h2_feats), jnp.float32),
        "w3": xavier_uniform(ks[4], (num_rel, h2_feats, num_classes)),
        "b3": 0.1 * jax.random.normal(ks[5], (num_rel, num_classes), jnp.float32),
    }


# ----------------------------------------------------------------------------
# Pure-JAX reference (mirrors the kernel's bf16-input / f32-accumulate math)
# ----------------------------------------------------------------------------
def hetero_gcn_reference(a_hat, x, params):
    a_bf = a_hat.astype(jnp.bfloat16)

    def layer(h, w, b, relu):
        h_bf = h.astype(jnp.bfloat16)
        y = jnp.zeros((h.shape[0], w.shape[2]), jnp.float32)
        for r in range(a_hat.shape[0]):
            xw = jnp.dot(h_bf, w[r].astype(jnp.bfloat16),
                         preferred_element_type=jnp.float32).astype(jnp.bfloat16)
            y = y + jnp.dot(a_bf[r], xw, preferred_element_type=jnp.float32)
        y = y + b.sum(axis=0)
        return jnp.maximum(y, 0.0) if relu else y

    h = layer(x, params["w1"], params["b1"], True)
    h = layer(h, params["w2"], params["b2"], True)
    return layer(h, params["w3"], params["b3"], False)


if __name__ == "__main__":
    # Small synthetic heterogeneous graph (3 relations, like FraudYelp's
    # net_rsr / net_rtr / net_rur), single node type.
    N = 64            # number of nodes
    R = 3             # number of relations / edge types
    IN_FEATS = 32
    H1_FEATS = 32
    H2_FEATS = 16
    NUM_CLASSES = 2

    key = jax.random.PRNGKey(0)
    k_adj, k_feat, k_param = jax.random.split(key, 3)

    # Dense random adjacencies per relation (a[r, i, j] = edge j -> i).
    adj = (jax.random.uniform(k_adj, (R, N, N)) < 0.1).astype(jnp.float32)
    a_hat = normalize_adjacency(adj)

    x = jax.random.normal(k_feat, (N, IN_FEATS), jnp.float32)
    params = init_params(k_param, R, IN_FEATS, H1_FEATS, H2_FEATS, NUM_CLASSES)

    # Graph- and parameter-static preprocessing done ONCE (hoisted out of the
    # per-forward path).
    a_cat = jax.block_until_ready(prepare_graph(a_hat))
    prep = jax.tree_util.tree_map(jax.block_until_ready, prepare_params(params))

    out = jax.block_until_ready(hetero_gcn_forward(a_cat, x, prep, NUM_CLASSES))
    ref = hetero_gcn_reference(a_hat, x, params)

    assert out.shape == (N, NUM_CLASSES)
    assert jnp.allclose(out, ref, atol=2e-2, rtol=2e-2), float(
        jnp.max(jnp.abs(out - ref)))

    print("KERNEL_OK")
</pallas_src>

<mosaic_0001>
module attributes {stable_mosaic.version = 11 : i64} {
  func.func @_fused_hetero_gcn_kernel(%arg0: memref<64x256xbf16, #tpu.memory_space<vmem>>, %arg1: memref<64x128xbf16, #tpu.memory_space<vmem>>, %arg2: memref<128x384xbf16, #tpu.memory_space<vmem>>, %arg3: memref<128x384xbf16, #tpu.memory_space<any>>, %arg4: memref<128x384xbf16, #tpu.memory_space<any>>, %arg5: memref<1x128xf32, #tpu.memory_space<vmem>>, %arg6: memref<1x128xf32, #tpu.memory_space<vmem>>, %arg7: memref<1x128xf32, #tpu.memory_space<vmem>>, %arg8: memref<64x128xf32, #tpu.memory_space<vmem>>, %arg9: memref<128x384xbf16, #tpu.memory_space<vmem>>, %arg10: memref<128x384xbf16, #tpu.memory_space<vmem>>, %arg11: memref<2x!tpu.dma_semaphore, #tpu.memory_space<semaphore_mem>>) attributes {dimension_semantics = [], scalar_prefetch = 0 : i64, scratch_operands = 3 : i64, tpu.core_type = #tpu.core_type<tc>} {
    %c0_i32 = arith.constant 0 : i32
    %0 = tpu.memref_slice %arg11[%c0_i32] : memref<2x!tpu.dma_semaphore, #tpu.memory_space<semaphore_mem>> -> memref<1x!tpu.dma_semaphore, #tpu.memory_space<semaphore_mem>>
    %1 = tpu.memref_squeeze %0 : memref<1x!tpu.dma_semaphore, #tpu.memory_space<semaphore_mem>> -> memref<!tpu.dma_semaphore, #tpu.memory_space<semaphore_mem>>
    tpu.enqueue_dma source(%arg3 : memref<128x384xbf16, #tpu.memory_space<any>>) target(%arg9 : memref<128x384xbf16, #tpu.memory_space<vmem>>) target_semaphore(%1 : memref<!tpu.dma_semaphore, #tpu.memory_space<semaphore_mem>>)
    %c1_i32 = arith.constant 1 : i32
    %2 = tpu.memref_slice %arg11[%c1_i32] : memref<2x!tpu.dma_semaphore, #tpu.memory_space<semaphore_mem>> -> memref<1x!tpu.dma_semaphore, #tpu.memory_space<semaphore_mem>>
    %3 = tpu.memref_squeeze %2 : memref<1x!tpu.dma_semaphore, #tpu.memory_space<semaphore_mem>> -> memref<!tpu.dma_semaphore, #tpu.memory_space<semaphore_mem>>
    tpu.enqueue_dma source(%arg4 : memref<128x384xbf16, #tpu.memory_space<any>>) target(%arg10 : memref<128x384xbf16, #tpu.memory_space<vmem>>) target_semaphore(%3 : memref<!tpu.dma_semaphore, #tpu.memory_space<semaphore_mem>>)
    %c0 = arith.constant 0 : index
    %c0_0 = arith.constant 0 : index
    %4 = vector.load %arg0[%c0, %c0_0] : memref<64x256xbf16, #tpu.memory_space<vmem>>, vector<64x256xbf16>
    %c0_1 = arith.constant 0 : index
    %c0_2 = arith.constant 0 : index
    %5 = vector.load %arg1[%c0_1, %c0_2] : memref<64x128xbf16, #tpu.memory_space<vmem>>, vector<64x128xbf16>
    %c0_3 = arith.constant 0 : index
    %c0_4 = arith.constant 0 : index
    %6 = vector.load %arg2[%c0_3, %c0_4] : memref<128x384xbf16, #tpu.memory_space<vmem>>, vector<128x384xbf16>
    %cst = arith.constant dense<0.000000e+00> : vector<64x384xf32>
    %7 = tpu.matmul %5, %6, %cst {dimension_numbers = #tpu.dot_dimension_numbers<[1], [0], [0], [1], [0, 0, 1, 1], [], []>} : vector<64x128xbf16>, vector<128x384xbf16>, vector<64x384xf32> -> vector<64x384xf32>
    %8 = arith.truncf %7 : vector<64x384xf32> to vector<64x384xbf16>
    %9 = vector.extract_strided_slice %8 {offsets = [0, 0], sizes = [64, 128], strides = [1, 1]} : vector<64x384xbf16> to vector<64x128xbf16>
    %10 = vector.extract_strided_slice %8 {offsets = [0, 128], sizes = [64, 128], strides = [1, 1]} : vector<64x384xbf16> to vector<64x128xbf16>
    %11 = vector.extract_strided_slice %8 {offsets = [0, 256], sizes = [64, 128], strides = [1, 1]} : vector<64x384xbf16> to vector<64x128xbf16>
    %cst_5 = arith.constant 0.000000e+00 : bf16
    %12 = vector.broadcast %cst_5 : bf16 to vector<64x128xbf16>
    %13 = tpu.concatenate %9, %10, %11, %12 in 0 : vector<64x128xbf16>, vector<64x128xbf16>, vector<64x128xbf16>, vector<64x128xbf16> -> vector<256x128xbf16>
    %cst_6 = arith.constant dense<0.000000e+00> : vector<64x128xf32>
    %14 = tpu.matmul %4, %13, %cst_6 {dimension_numbers = #tpu.dot_dimension_numbers<[1], [0], [0], [1], [0, 0, 1, 1], [], []>} : vector<64x256xbf16>, vector<256x128xbf16>, vector<64x128xf32> -> vector<64x128xf32>
    %c0_7 = arith.constant 0 : index
    %c0_8 = arith.constant 0 : index
    %15 = vector.load %arg5[%c0_7, %c0_8] : memref<1x128xf32, #tpu.memory_space<vmem>>, vector<1x128xf32>
    %16 = vector.broadcast %15 : vector<1x128xf32> to vector<64x128xf32>
    %17 = arith.addf %14, %16 : vector<64x128xf32>
    %cst_9 = arith.constant 0.000000e+00 : f32
    %18 = vector.broadcast %cst_9 : f32 to vector<64x128xf32>
    %19 = arith.maximumf %17, %18 : vector<64x128xf32>
    %c0_i32_10 = arith.constant 0 : i32
    %20 = tpu.memref_slice %arg11[%c0_i32_10] : memref<2x!tpu.dma_semaphore, #tpu.memory_space<semaphore_mem>> -> memref<1x!tpu.dma_semaphore, #tpu.memory_space<semaphore_mem>>
    %21 = tpu.memref_squeeze %20 : memref<1x!tpu.dma_semaphore, #tpu.memory_space<semaphore_mem>> -> memref<!tpu.dma_semaphore, #tpu.memory_space<semaphore_mem>>
    tpu.wait_dma2 semaphore(%21 : memref<!tpu.dma_semaphore, #tpu.memory_space<semaphore_mem>>) src(%arg3 : memref<128x384xbf16, #tpu.memory_space<any>>) dst(%arg9 : memref<128x384xbf16, #tpu.memory_space<vmem>>)
    %22 = arith.truncf %19 : vector<64x128xf32> to vector<64x128xbf16>
    %c0_11 = arith.constant 0 : index
    %c0_12 = arith.constant 0 : index
    %23 = vector.load %arg9[%c0_11, %c0_12] : memref<128x384xbf16, #tpu.memory_space<vmem>>, vector<128x384xbf16>
    %cst_13 = arith.constant dense<0.000000e+00> : vector<64x384xf32>
    %24 = tpu.matmul %22, %23, %cst_13 {dimension_numbers = #tpu.dot_dimension_numbers<[1], [0], [0], [1], [0, 0, 1, 1], [], []>} : vector<64x128xbf16>, vector<128x384xbf16>, vector<64x384xf32> -> vector<64x384xf32>
    %25 = arith.truncf %24 : vector<64x384xf32> to vector<64x384xbf16>
    %26 = vector.extract_strided_slice %25 {offsets = [0, 0], sizes = [64, 128], strides = [1, 1]} : vector<64x384xbf16> to vector<64x128xbf16>
    %27 = vector.extract_strided_slice %25 {offsets = [0, 128], sizes = [64, 128], strides = [1, 1]} : vector<64x384xbf16> to vector<64x128xbf16>
    %28 = vector.extract_strided_slice %25 {offsets = [0, 256], sizes = [64, 128], strides = [1, 1]} : vector<64x384xbf16> to vector<64x128xbf16>
    %cst_14 = arith.constant 0.000000e+00 : bf16
    %29 = vector.broadcast %cst_14 : bf16 to vector<64x128xbf16>
    %30 = tpu.concatenate %26, %27, %28, %29 in 0 : vector<64x128xbf16>, vector<64x128xbf16>, vector<64x128xbf16>, vector<64x128xbf16> -> vector<256x128xbf16>
    %cst_15 = arith.constant dense<0.000000e+00> : vector<64x128xf32>
    %31 = tpu.matmul %4, %30, %cst_15 {dimension_numbers = #tpu.dot_dimension_numbers<[1], [0], [0], [1], [0, 0, 1, 1], [], []>} : vector<64x256xbf16>, vector<256x128xbf16>, vector<64x128xf32> -> vector<64x128xf32>
    %c0_16 = arith.constant 0 : index
    %c0_17 = arith.constant 0 : index
    %32 = vector.load %arg6[%c0_16, %c0_17] : memref<1x128xf32, #tpu.memory_space<vmem>>, vector<1x128xf32>
    %33 = vector.broadcast %32 : vector<1x128xf32> to vector<64x128xf32>
    %34 = arith.addf %31, %33 : vector<64x128xf32>
    %cst_18 = arith.constant 0.000000e+00 : f32
    %35 = vector.broadcast %cst_18 : f32 to vector<64x128xf32>
    %36 = arith.maximumf %34, %35 : vector<64x128xf32>
    %c1_i32_19 = arith.constant 1 : i32
    %37 = tpu.memref_slice %arg11[%c1_i32_19] : memref<2x!tpu.dma_semaphore, #tpu.memory_space<semaphore_mem>> -> memref<1x!tpu.dma_semaphore, #tpu.memory_space<semaphore_mem>>
    %38 = tpu.memref_squeeze %37 : memref<1x!tpu.dma_semaphore, #tpu.memory_space<semaphore_mem>> -> memref<!tpu.dma_semaphore, #tpu.memory_space<semaphore_mem>>
    tpu.wait_dma2 semaphore(%38 : memref<!tpu.dma_semaphore, #tpu.memory_space<semaphore_mem>>) src(%arg4 : memref<128x384xbf16, #tpu.memory_space<any>>) dst(%arg10 : memref<128x384xbf16, #tpu.memory_space<vmem>>)
    %39 = arith.truncf %36 : vector<64x128xf32> to vector<64x128xbf16>
    %c0_20 = arith.constant 0 : index
    %c0_21 = arith.constant 0 : index
    %40 = vector.load %arg10[%c0_20, %c0_21] : memref<128x384xbf16, #tpu.memory_space<vmem>>, vector<128x384xbf16>
    %cst_22 = arith.constant dense<0.000000e+00> : vector<64x384xf32>
    %41 = tpu.matmul %39, %40, %cst_22 {dimension_numbers = #tpu.dot_dimension_numbers<[1], [0], [0], [1], [0, 0, 1, 1], [], []>} : vector<64x128xbf16>, vector<128x384xbf16>, vector<64x384xf32> -> vector<64x384xf32>
    %42 = arith.truncf %41 : vector<64x384xf32> to vector<64x384xbf16>
    %43 = vector.extract_strided_slice %42 {offsets = [0, 0], sizes = [64, 128], strides = [1, 1]} : vector<64x384xbf16> to vector<64x128xbf16>
    %44 = vector.extract_strided_slice %42 {offsets = [0, 128], sizes = [64, 128], strides = [1, 1]} : vector<64x384xbf16> to vector<64x128xbf16>
    %45 = vector.extract_strided_slice %42 {offsets = [0, 256], sizes = [64, 128], strides = [1, 1]} : vector<64x384xbf16> to vector<64x128xbf16>
    %cst_23 = arith.constant 0.000000e+00 : bf16
    %46 = vector.broadcast %cst_23 : bf16 to vector<64x128xbf16>
    %47 = tpu.concatenate %43, %44, %45, %46 in 0 : vector<64x128xbf16>, vector<64x128xbf16>, vector<64x128xbf16>, vector<64x128xbf16> -> vector<256x128xbf16>
    %cst_24 = arith.constant dense<0.000000e+00> : vector<64x128xf32>
    %48 = tpu.matmul %4, %47, %cst_24 {dimension_numbers = #tpu.dot_dimension_numbers<[1], [0], [0], [1], [0, 0, 1, 1], [], []>} : vector<64x256xbf16>, vector<256x128xbf16>, vector<64x128xf32> -> vector<64x128xf32>
    %c0_25 = arith.constant 0 : index
    %c0_26 = arith.constant 0 : index
    %49 = vector.load %arg7[%c0_25, %c0_26] : memref<1x128xf32, #tpu.memory_space<vmem>>, vector<1x128xf32>
    %50 = vector.broadcast %49 : vector<1x128xf32> to vector<64x128xf32>
    %51 = arith.addf %48, %50 : vector<64x128xf32>
    %c0_27 = arith.constant 0 : index
    %c0_28 = arith.constant 0 : index
    %52 = vector.load %arg8[%c0_27, %c0_28] : memref<64x128xf32, #tpu.memory_space<vmem>>, vector<64x128xf32>
    tpu.vector_store %arg8[%c0_27, %c0_28], %51 {strides = array<i32>} : memref<64x128xf32, #tpu.memory_space<vmem>>, vector<64x128xf32>,
    return
  }
}

</mosaic_0001>

<llo_original>
// kernel: _forward_padded.1
$region0: #{_forward_padded.1}
  #allocation0 [shape = 'u32[]', space=smem, size = 0x4, offset = 0x4, fixed_abs, tag = 'smem constant byte address 0x4 - core index']
  #allocation1 [shape = 'u32[144,128]{1,0:T(1,128)}', space=vmem, size = 0x12000, scoped, tag = 'internal scratch']
  #allocation2 [shape = 'bf16[128,384]{1,0:T(16,128)(2,1)}', space=vmem, size = 0x18000, scoped, tag = 'scratch operand']
  #allocation3 [shape = 'bf16[128,384]{1,0:T(16,128)(2,1)}', space=vmem, size = 0x18000, scoped, tag = 'scratch operand']
  #allocation4 [shape = 's32[2]{0}', space=sflag, size = 0x8, scoped, tag = 'scratch operand']
  #allocation9 [shape = 's32[]', space=sflag, size = 0x4, offset = 0, fixed_abs, tag = 'sflag constant byte address 0x0 - dummy sync flag']
  #allocation11 [shape = 's32[]', space=sflag, size = 0x4, offset = 0, fixed_abs, tag = 'sflag constant byte address 0x0 - dummy sync flag']
  %s0 = inlined_call_operand.hbm [shape: bf16[64,256], index: 0, kind: input, shape index: {}]
  %s1 = inlined_call_operand.vmem [shape: bf16[64,128], index: 1, kind: input, shape index: {}]
  %s2 = inlined_call_operand.vmem [shape: bf16[128,384], index: 2, kind: input, shape index: {}]
  %s3 = inlined_call_operand.hbm [shape: bf16[128,384], index: 3, kind: input, shape index: {}]
  %s4 = inlined_call_operand.hbm [shape: bf16[128,384], index: 4, kind: input, shape index: {}]
  %s5 = inlined_call_operand.vmem [shape: f32[1,128], index: 5, kind: input, shape index: {}]
  %s6 = inlined_call_operand.vmem [shape: f32[1,128], index: 6, kind: input, shape index: {}]
  %s7 = inlined_call_operand.vmem [shape: f32[1,128], index: 7, kind: input, shape index: {}]
  %s8 = inlined_call_operand.hbm [shape: f32[64,128], index: 8, kind: output, shape index: {}]
  %s9 = sld [smem:[#allocation0]]
  $region38: #{_forward_padded.1} parent=0
    _
  %s11 = ssub.s32 1, %s9
  %s12 = scalar_select 0, %s11, %s9
  $region1: #{_forward_padded.1} parent=0
    #allocation5 [shape = 'u8[32768]{0}', space=vmem, size = 0x8000, scoped, tag = 'input window, operand 0, single buffered']
    #allocation6 [shape = 's32[1]{0}', space=sflag, size = 0x4, scoped, tag = 'scoped memory for _forward_padded.1']
    #allocation7 [shape = 's32[1]{0}', space=sflag, size = 0x4, scoped, tag = 'scoped memory for _forward_padded.1']
    #allocation8 [shape = 'u8[32768]{0}', space=vmem, size = 0x8000, scoped, tag = 'output window, operand 0, single buffered']
    #allocation10 [shape = 'u32[9]{0}', space=smem, size = 0x24, scoped, tag = 'DMA stride descriptor']
    #allocation12 [shape = 'u32[9]{0}', space=smem, size = 0x24, scoped, tag = 'DMA stride descriptor']
    %13 = vsyncpa [#allocation6], 0
    %14 = vsyncpa [#allocation7], 0
    // Predicated region
    $region2: #{_forward_padded.1} parent=1 // pred_check
      _
    $region3: #{_forward_padded.1} parent=1 // pred_check_branch
      %16 = sbr.rel (0) target = $region5
    $region4: #{_forward_padded.1} parent=1 // pred_region
      %s18 = ssub.s32 1024, 1024
      %19 = vsyncadd [#allocation6], %s18
      %s20 = sshll.u32 [#allocation5], 4
      %s21 = int_to_ptr.vmem [resolvable:$true] %s20
      %26 = dma.hbm_to_vmem [thread:$0]  %s0, 1024, %s21, [#allocation6], 128, 128, 8
    $region5: #{_forward_padded.1} parent=1 // pred_fallthru
      _
    // Predicated region
    $region6: #{_forward_padded.1} parent=1 // pred_check
      _
    $region7: #{_forward_padded.1} parent=1 // pred_check_branch
      %28 = sbr.rel (0) target = $region9
    $region8: #{_forward_padded.1} parent=1 // pred_region
      _
    $region9: #{_forward_padded.1} parent=1 // pred_fallthru
      _
    // Predicated region
    $region10: #{_forward_padded.1} parent=1 // pred_check
      _
    $region11: #{_forward_padded.1} parent=1 // pred_check_branch
      %30 = sbr.rel (0) target = $region13
    $region12: #{_forward_padded.1} parent=1 // pred_region
      _
    $region13: #{_forward_padded.1} parent=1 // pred_fallthru
      _
    // Predicated region
    $region14: #{_forward_padded.1} parent=1 // pred_check
      _
    $region15: #{_forward_padded.1} parent=1 // pred_check_branch
      %32 = sbr.rel (0) target = $region17
    $region16: #{_forward_padded.1} parent=1 // pred_region
      _
    $region17: #{_forward_padded.1} parent=1 // pred_fallthru
      _
    // Predicated region
    $region18: #{_forward_padded.1} parent=1 // pred_check
      _
    $region19: #{_forward_padded.1} parent=1 // pred_check_branch
      %34 = sbr.rel (0) target = $region21
    $region20: #{_forward_padded.1} parent=1 // pred_region
      _
    $region21: #{_forward_padded.1} parent=1 // pred_fallthru
      _
    // Predicated region
    $region22: #{_forward_padded.1} parent=1 // pred_check
      _
    $region23: #{_forward_padded.1} parent=1 // pred_check_branch
      %36 = sbr.rel (0) target = $region25
    $region24: #{_forward_padded.1} parent=1 // pred_region
      _
    $region25: #{_forward_padded.1} parent=1 // pred_fallthru
      _
    // Predicated region
    $region26: #{_forward_padded.1} parent=1 // pred_check
      _
    $region27: #{_forward_padded.1} parent=1 // pred_check_branch
      %38 = sbr.rel (0) target = $region29
    $region28: #{_forward_padded.1} parent=1 // pred_region
      %39 = dma.done [#allocation6], 1024
    $region29: #{_forward_padded.1} parent=1 // pred_fallthru
      _
    %s42 = sshll.u32 1, 14
    %s43 = sxor.u32 4294967295, %s42
    %s45 = sld [smem:[#allocation0]]
    %s46 = sadd.s32 2, %s45
    %s48 = sshll.u32 7, 26
    %s49 = sxor.u32 4294967295, %s48
    %s50 = sand.u32 0, %s49
    %s51 = sshll.u32 %s46, 26
    %s52 = sor.u32 %s50, %s51
    %s53 = sshll.u32 [#allocation2], 4
    %s54 = int_to_ptr.vmem [resolvable:$true] %s53
    %57 = sst [smem:[#allocation10]] 384
    %s58 = scalar_lea.smem [#allocation10], 1
    %59 = sst [smem:[%s58]] 384
    %s60 = scalar_lea.smem [#allocation10], 2
    %61 = sst [smem:[%s60]] 3
    %s62 = scalar_lea.smem [#allocation10], 3
    %63 = sst [smem:[%s62]] 64
    %s64 = scalar_lea.smem [#allocation10], 4
    %65 = sst [smem:[%s64]] 128
    %s66 = scalar_lea.smem [#allocation10], 5
    %67 = sst [smem:[%s66]] 2
    %s68 = scalar_lea.smem [#allocation10], 6
    %69 = sst [smem:[%s68]] 192
    %s70 = scalar_lea.smem [#allocation10], 7
    %71 = sst [smem:[%s70]] 64
    %s72 = scalar_lea.smem [#allocation10], 8
    %73 = sst [smem:[%s72]] 4
    %75 = dma.general %s3, 3072, %s54, [#allocation4], [#allocation9], [#allocation10], %s52, 0
    %s76 = scalar_lea.sflag [#allocation4], 1
    %s78 = sshll.u32 1, 14
    %s79 = sxor.u32 4294967295, %s78
    %s81 = sadd.s32 2, %s45
    %s83 = sshll.u32 7, 26
    %s84 = sxor.u32 4294967295, %s83
    %s85 = sand.u32 0, %s84
    %s86 = sshll.u32 %s81, 26
    %s87 = sor.u32 %s85, %s86
    %s88 = sshll.u32 [#allocation3], 4
    %s89 = int_to_ptr.vmem [resolvable:$true] %s88
    %92 = sst [smem:[#allocation12]] 384
    %s93 = scalar_lea.smem [#allocation12], 1
    %94 = sst [smem:[%s93]] 384
    %s95 = scalar_lea.smem [#allocation12], 2
    %96 = sst [smem:[%s95]] 3
    %s97 = scalar_lea.smem [#allocation12], 3
    %98 = sst [smem:[%s97]] 64
    %s99 = scalar_lea.smem [#allocation12], 4
    %100 = sst [smem:[%s99]] 128
    %s101 = scalar_lea.smem [#allocation12], 5
    %102 = sst [smem:[%s101]] 2
    %s103 = scalar_lea.smem [#allocation12], 6
    %104 = sst [smem:[%s103]] 192
    %s105 = scalar_lea.smem [#allocation12], 7
    %106 = sst [smem:[%s105]] 64
    %s107 = scalar_lea.smem [#allocation12], 8
    %108 = sst [smem:[%s107]] 4
    %110 = dma.general %s4, 3072, %s89, %s76, [#allocation11], [#allocation12], %s87, 0
    %v111 = vld [vmem:[#allocation5] sm:$0xff]
    %v112 = vld [vmem:[#allocation5 + $0x8] sm:$0xff]
    %v113 = vld [vmem:[#allocation5 + $0x10] sm:$0xff]
    %v114 = vld [vmem:[#allocation5 + $0x18] sm:$0xff]
    %v115 = vld [vmem:[#allocation5 + $0x20] sm:$0xff]
    %v116 = vld [vmem:[#allocation5 + $0x28] sm:$0xff]
    %v117 = vld [vmem:[#allocation5 + $0x30] sm:$0xff]
    %v118 = vld [vmem:[#allocation5 + $0x38] sm:$0xff]
    %v119 = vld [vmem:[%s1] sm:$0xf]
    %v120 = vld [vmem:[%s1 + $0x4] sm:$0xf]
    %v121 = vld [vmem:[%s1 + $0x8] sm:$0xf]
    %v122 = vld [vmem:[%s1 + $0xc] sm:$0xf]
    %v123 = vld [vmem:[%s1 + $0x10] sm:$0xf]
    %v124 = vld [vmem:[%s1 + $0x14] sm:$0xf]
    %v125 = vld [vmem:[%s1 + $0x18] sm:$0xf]
    %v126 = vld [vmem:[%s1 + $0x1c] sm:$0xf]
    %v127 = vld [vmem:[%s2] sm:$0xff]
    %v128 = vld [vmem:[%s2 + $0x8] sm:$0xf]
    %v129 = vld [vmem:[%s2 + $0xc] sm:$0xff]
    %v130 = vld [vmem:[%s2 + $0x14] sm:$0xf]
    %v131 = vld [vmem:[%s2 + $0x18] sm:$0xff]
    %v132 = vld [vmem:[%s2 + $0x20] sm:$0xf]
    %v133 = vld [vmem:[%s2 + $0x24] sm:$0xff]
    %v134 = vld [vmem:[%s2 + $0x2c] sm:$0xf]
    %v135 = vld [vmem:[%s2 + $0x30] sm:$0xff]
    %v136 = vld [vmem:[%s2 + $0x38] sm:$0xf]
    %v137 = vld [vmem:[%s2 + $0x3c] sm:$0xff]
    %v138 = vld [vmem:[%s2 + $0x44] sm:$0xf]
    %v139 = vld [vmem:[%s2 + $0x48] sm:$0xff]
    %v140 = vld [vmem:[%s2 + $0x50] sm:$0xf]
    %v141 = vld [vmem:[%s2 + $0x54] sm:$0xff]
    %v142 = vld [vmem:[%s2 + $0x5c] sm:$0xf]
    %v143 = vld [vmem:[%s2 + $0x60] sm:$0xff]
    %v144 = vld [vmem:[%s2 + $0x68] sm:$0xf]
    %v145 = vld [vmem:[%s2 + $0x6c] sm:$0xff]
    %v146 = vld [vmem:[%s2 + $0x74] sm:$0xf]
    %v147 = vld [vmem:[%s2 + $0x78] sm:$0xff]
    %v148 = vld [vmem:[%s2 + $0x80] sm:$0xf]
    %v149 = vld [vmem:[%s2 + $0x84] sm:$0xff]
    %v150 = vld [vmem:[%s2 + $0x8c] sm:$0xf]
    %v151 = vld [vmem:[%s2 + $0x90] sm:$0xff]
    %v152 = vld [vmem:[%s2 + $0x98] sm:$0xf]
    %v153 = vld [vmem:[%s2 + $0x9c] sm:$0xff]
    %v154 = vld [vmem:[%s2 + $0xa4] sm:$0xf]
    %v155 = vld [vmem:[%s2 + $0xa8] sm:$0xff]
    %v156 = vld [vmem:[%s2 + $0xb0] sm:$0xf]
    %v157 = vld [vmem:[%s2 + $0xb4] sm:$0xff]
    %v158 = vld [vmem:[%s2 + $0xbc] sm:$0xf]
    %v167 = vunpack.c.l.b16 %v119
    %v168 = vunpack.c.l.b16 %v120
    %v169 = vunpack.c.l.b16 %v121
    %v170 = vunpack.c.l.b16 %v122
    %v171 = vunpack.c.l.b16 %v123
    %v172 = vunpack.c.l.b16 %v124
    %v173 = vunpack.c.l.b16 %v125
    %v174 = vunpack.c.l.b16 %v126
    %v175 = vpack.c.b16 %v168, %v167
    %v176 = vpack.c.b16 %v170, %v169
    %v177 = vpack.c.b16 %v172, %v171
    %v178 = vpack.c.b16 %v174, %v173
    %v215 = vunpack.c.l.b16 %v127
    %v216 = vunpack.c.h.b16 %v127
    %v217 = vunpack.c.l.b16 %v128
    %v218 = vunpack.c.l.b16 %v129
    %v219 = vunpack.c.h.b16 %v129
    %v220 = vunpack.c.l.b16 %v130
    %v221 = vunpack.c.l.b16 %v131
    %v222 = vunpack.c.h.b16 %v131
    %v223 = vunpack.c.l.b16 %v132
    %v224 = vunpack.c.l.b16 %v133
    %v225 = vunpack.c.h.b16 %v133
    %v226 = vunpack.c.l.b16 %v134
    %v227 = vunpack.c.l.b16 %v135
    %v228 = vunpack.c.h.b16 %v135
    %v229 = vunpack.c.l.b16 %v136
    %v230 = vunpack.c.l.b16 %v137
    %v231 = vunpack.c.h.b16 %v137
    %v232 = vunpack.c.l.b16 %v138
    %v233 = vunpack.c.l.b16 %v139
    %v234 = vunpack.c.h.b16 %v139
    %v235 = vunpack.c.l.b16 %v140
    %v236 = vunpack.c.l.b16 %v141
    %v237 = vunpack.c.h.b16 %v141
    %v238 = vunpack.c.l.b16 %v142
    %v239 = vunpack.c.l.b16 %v143
    %v240 = vunpack.c.h.b16 %v143
    %v241 = vunpack.c.l.b16 %v144
    %v242 = vunpack.c.l.b16 %v145
    %v243 = vunpack.c.h.b16 %v145
    %v244 = vunpack.c.l.b16 %v146
    %v245 = vunpack.c.l.b16 %v147
    %v246 = vunpack.c.h.b16 %v147
    %v247 = vunpack.c.l.b16 %v148
    %v248 = vunpack.c.l.b16 %v149
    %v249 = vunpack.c.h.b16 %v149
    %v250 = vunpack.c.l.b16 %v150
    %v251 = vunpack.c.l.b16 %v151
    %v252 = vunpack.c.h.b16 %v151
    %v253 = vunpack.c.l.b16 %v152
    %v254 = vunpack.c.l.b16 %v153
    %v255 = vunpack.c.h.b16 %v153
    %v256 = vunpack.c.l.b16 %v154
    %v257 = vunpack.c.l.b16 %v155
    %v258 = vunpack.c.h.b16 %v155
    %v259 = vunpack.c.l.b16 %v156
    %v260 = vunpack.c.l.b16 %v157
    %v261 = vunpack.c.h.b16 %v157
    %v262 = vunpack.c.l.b16 %v158
    %v263 = vpack.c.b16 %v218, %v215
    %v264 = vpack.c.b16 %v219, %v216
    %v265 = vpack.c.b16 %v220, %v217
    %v266 = vpack.c.b16 %v224, %v221
    %v267 = vpack.c.b16 %v225, %v222
    %v268 = vpack.c.b16 %v226, %v223
    %v269 = vpack.c.b16 %v230, %v227
    %v270 = vpack.c.b16 %v231, %v228
    %v271 = vpack.c.b16 %v232, %v229
    %v272 = vpack.c.b16 %v236, %v233
    %v273 = vpack.c.b16 %v237, %v234
    %v274 = vpack.c.b16 %v238, %v235
    %v275 = vpack.c.b16 %v242, %v239
    %v276 = vpack.c.b16 %v243, %v240
    %v277 = vpack.c.b16 %v244, %v241
    %v278 = vpack.c.b16 %v248, %v245
    %v279 = vpack.c.b16 %v249, %v246
    %v280 = vpack.c.b16 %v250, %v247
    %v281 = vpack.c.b16 %v254, %v251
    %v282 = vpack.c.b16 %v255, %v252
    %v283 = vpack.c.b16 %v256, %v253
    %v284 = vpack.c.b16 %v260, %v257
    %v285 = vpack.c.b16 %v261, %v258
    %v286 = vpack.c.b16 %v262, %v259
    %311 = vmatprep.subr.bf16.mxu0 %v264
    %312 = vmatpush1.bf16.msra.mxu0 %v263
    %313 = vmatprep.subr.bf16.mxu0 %v267
    %314 = vmatpush1.bf16.msra.mxu0 %v266
    %315 = vmatprep.subr.bf16.mxu0 %v270
    %316 = vmatpush1.bf16.msra.mxu0 %v269
    %317 = vmatprep.subr.bf16.mxu0 %v273
    %318 = vmatpush1.bf16.msra.mxu0 %v272
    %319 = vmatprep.subr.bf16.mxu0 %v276
    %320 = vmatpush1.bf16.msra.mxu0 %v275
    %321 = vmatprep.subr.bf16.mxu0 %v279
    %322 = vmatpush1.bf16.msra.mxu0 %v278
    %323 = vmatprep.subr.bf16.mxu0 %v282
    %324 = vmatpush1.bf16.msra.mxu0 %v281
    %325 = vmatprep.subr.bf16.mxu0 %v285
    %326 = vmatpush1.bf16.msra.mxu0 %v284
    %327 = vmatprep.subr.bf16.mxu0 0
    %328 = vmatpush1.bf16.msra.mxu0 0
    %329 = vmatprep.subr.bf16.mxu0 0
    %330 = vmatpush1.bf16.msra.mxu0 0
    %331 = vmatprep.subr.bf16.mxu0 0
    %332 = vmatpush1.bf16.msra.mxu0 0
    %333 = vmatprep.subr.bf16.mxu0 0
    %334 = vmatpush1.bf16.msra.mxu0 0
    %335 = vmatprep.subr.bf16.mxu0 0
    %336 = vmatpush1.bf16.msra.mxu0 0
    %337 = vmatprep.subr.bf16.mxu0 0
    %338 = vmatpush1.bf16.msra.mxu0 0
    %339 = vmatprep.subr.bf16.mxu0 0
    %340 = vmatpush1.bf16.msra.mxu0 0
    %341 = vmatprep.subr.bf16.mxu0 0
    %342 = vmatpush1.bf16.msra.mxu0 0
    %343 = vmatprep.mubr.bf16.mxu0 0
    %344 = vmatmul.mubr.bf16.gmra.mrb[0].mxu0 %v175
    %v345 = vpop.f32.mrb[0].mxu0
    %v346 = vadd.f32 0.0, %v345
    %v347 = vpop.f32.mrb[0].mxu0
    %v348 = vadd.f32 0.0, %v347
    %v349 = vpop.f32.mrb[0].mxu0
    %v350 = vadd.f32 0.0, %v349
    %v351 = vpop.f32.mrb[0].mxu0
    %v352 = vadd.f32 0.0, %v351
    %353 = vmatprep.mubr.bf16.mxu0 0
    %354 = vmatmul.mubr.bf16.gmra.mrb[0].mxu0 %v176
    %v355 = vpop.f32.mrb[0].mxu0
    %v356 = vadd.f32 0.0, %v355
    %v357 = vpop.f32.mrb[0].mxu0
    %v358 = vadd.f32 0.0, %v357
    %v359 = vpop.f32.mrb[0].mxu0
    %v360 = vadd.f32 0.0, %v359
    %v361 = vpop.f32.mrb[0].mxu0
    %v362 = vadd.f32 0.0, %v361
    %363 = vmatprep.mubr.bf16.mxu0 0
    %364 = vmatmul.mubr.bf16.gmra.mrb[0].mxu0 %v177
    %v365 = vpop.f32.mrb[0].mxu0
    %v366 = vadd.f32 0.0, %v365
    %v367 = vpop.f32.mrb[0].mxu0
    %v368 = vadd.f32 0.0, %v367
    %v369 = vpop.f32.mrb[0].mxu0
    %v370 = vadd.f32 0.0, %v369
    %v371 = vpop.f32.mrb[0].mxu0
    %v372 = vadd.f32 0.0, %v371
    %373 = vmatprep.mubr.bf16.mxu0 0
    %374 = vmatmul.mubr.bf16.gmra.mrb[0].mxu0 %v178
    %v375 = vpop.f32.mrb[0].mxu0
    %v376 = vadd.f32 0.0, %v375
    %v377 = vpop.f32.mrb[0].mxu0
    %v378 = vadd.f32 0.0, %v377
    %v379 = vpop.f32.mrb[0].mxu0
    %v380 = vadd.f32 0.0, %v379
    %v381 = vpop.f32.mrb[0].mxu0
    %v382 = vadd.f32 0.0, %v381
    %383 = vdwg.mxu0
    %384 = vmatprep.subr.bf16.mxu0 0
    %385 = vmatpush1.bf16.msra.mxu0 %v265
    %386 = vmatprep.subr.bf16.mxu0 0
    %387 = vmatpush1.bf16.msra.mxu0 %v268
    %388 = vmatprep.subr.bf16.mxu0 0
    %389 = vmatpush1.bf16.msra.mxu0 %v271
    %390 = vmatprep.subr.bf16.mxu0 0
    %391 = vmatpush1.bf16.msra.mxu0 %v274
    %392 = vmatprep.subr.bf16.mxu0 0
    %393 = vmatpush1.bf16.msra.mxu0 %v277
    %394 = vmatprep.subr.bf16.mxu0 0
    %395 = vmatpush1.bf16.msra.mxu0 %v280
    %396 = vmatprep.subr.bf16.mxu0 0
    %397 = vmatpush1.bf16.msra.mxu0 %v283
    %398 = vmatprep.subr.bf16.mxu0 0
    %399 = vmatpush1.bf16.msra.mxu0 %v286
    %400 = vmatprep.subr.bf16.mxu0 0
    %401 = vmatpush1.bf16.msra.mxu0 0
    %402 = vmatprep.subr.bf16.mxu0 0
    %403 = vmatpush1.bf16.msra.mxu0 0
    %404 = vmatprep.subr.bf16.mxu0 0
    %405 = vmatpush1.bf16.msra.mxu0 0
    %406 = vmatprep.subr.bf16.mxu0 0
    %407 = vmatpush1.bf16.msra.mxu0 0
    %408 = vmatprep.subr.bf16.mxu0 0
    %409 = vmatpush1.bf16.msra.mxu0 0
    %410 = vmatprep.subr.bf16.mxu0 0
    %411 = vmatpush1.bf16.msra.mxu0 0
    %412 = vmatprep.subr.bf16.mxu0 0
    %413 = vmatpush1.bf16.msra.mxu0 0
    %414 = vmatprep.subr.bf16.mxu0 0
    %415 = vmatpush1.bf16.msra.mxu0 0
    %416 = vmatprep.mubr.bf16.mxu0 0
    %417 = vmatmul.mubr.bf16.gmra.mrb[0].mxu0 %v175
    %v418 = vpop.f32.mrb[0].mxu0
    %v419 = vadd.f32 0.0, %v418
    %v420 = vpop.f32.mrb[0].mxu0
    %v421 = vpop.f32.mrb[0].mxu0
    %v422 = vadd.f32 0.0, %v421
    %v423 = vpop.f32.mrb[0].mxu0
    %424 = vmatprep.mubr.bf16.mxu0 0
    %425 = vmatmul.mubr.bf16.gmra.mrb[0].mxu0 %v176
    %v426 = vpop.f32.mrb[0].mxu0
    %v427 = vadd.f32 0.0, %v426
    %v428 = vpop.f32.mrb[0].mxu0
    %v429 = vpop.f32.mrb[0].mxu0
    %v430 = vadd.f32 0.0, %v429
    %v431 = vpop.f32.mrb[0].mxu0
    %432 = vmatprep.mubr.bf16.mxu0 0
    %433 = vmatmul.mubr.bf16.gmra.mrb[0].mxu0 %v177
    %v434 = vpop.f32.mrb[0].mxu0
    %v435 = vadd.f32 0.0, %v434
    %v436 = vpop.f32.mrb[0].mxu0
    %v437 = vpop.f32.mrb[0].mxu0
    %v438 = vadd.f32 0.0, %v437
    %v439 = vpop.f32.mrb[0].mxu0
    %440 = vmatprep.mubr.bf16.mxu0 0
    %441 = vmatmul.mubr.bf16.gmra.mrb[0].mxu0 %v178
    %v442 = vpop.f32.mrb[0].mxu0
    %v443 = vadd.f32 0.0, %v442
    %v444 = vpop.f32.mrb[0].mxu0
    %v445 = vpop.f32.mrb[0].mxu0
    %v446 = vadd.f32 0.0, %v445
    %v447 = vpop.f32.mrb[0].mxu0
    %448 = vdwg.mxu0
    %v449 = vpack.c.bf16 %v350, %v346
    %v450 = vpack.c.bf16 %v352, %v348
    %v451 = vpack.c.bf16 %v422, %v419
    %v452 = vpack.c.bf16 %v360, %v356
    %v453 = vpack.c.bf16 %v362, %v358
    %v454 = vpack.c.bf16 %v430, %v427
    %v455 = vpack.c.bf16 %v370, %v366
    %v456 = vpack.c.bf16 %v372, %v368
    %v457 = vpack.c.bf16 %v438, %v435
    %v458 = vpack.c.bf16 %v380, %v376
    %v459 = vpack.c.bf16 %v382, %v378
    %v460 = vpack.c.bf16 %v446, %v443
    %v461 = vld [vmem:[%s5] sm:$0x1]
    %v463 = vlaneseq
    %v464 = vshrl.u32 %v463, 7
    %v465 = vsub.s32 0, %v464
    %v466 = vrot.slane %v461, %v465
    %v476 = vunpack.c.l.b16 %v111
    %v477 = vunpack.c.h.b16 %v111
    %v478 = vunpack.c.l.b16 %v112
    %v479 = vunpack.c.h.b16 %v112
    %v480 = vunpack.c.l.b16 %v113
    %v481 = vunpack.c.h.b16 %v113
    %v482 = vunpack.c.l.b16 %v114
    %v483 = vunpack.c.h.b16 %v114
    %v484 = vunpack.c.l.b16 %v115
    %v485 = vunpack.c.h.b16 %v115
    %v486 = vunpack.c.l.b16 %v116
    %v487 = vunpack.c.h.b16 %v116
    %v488 = vunpack.c.l.b16 %v117
    %v489 = vunpack.c.h.b16 %v117
    %v490 = vunpack.c.l.b16 %v118
    %v491 = vunpack.c.h.b16 %v118
    %v492 = vpack.c.b16 %v478, %v476
    %v493 = vpack.c.b16 %v479, %v477
    %v494 = vpack.c.b16 %v482, %v480
    %v495 = vpack.c.b16 %v483, %v481
    %v496 = vpack.c.b16 %v486, %v484
    %v497 = vpack.c.b16 %v487, %v485
    %v498 = vpack.c.b16 %v490, %v488
    %v499 = vpack.c.b16 %v491, %v489
    %508 = vmatprep.subr.bf16.mxu0 0
    %509 = vmatpush1.bf16.msra.mxu0 %v449
    %510 = vmatprep.subr.bf16.mxu0 0
    %511 = vmatpush1.bf16.msra.mxu0 %v452
    %512 = vmatprep.subr.bf16.mxu0 0
    %513 = vmatpush1.bf16.msra.mxu0 %v455
    %514 = vmatprep.subr.bf16.mxu0 0
    %515 = vmatpush1.bf16.msra.mxu0 %v458
    %516 = vmatprep.subr.bf16.mxu0 0
    %517 = vmatpush1.bf16.msra.mxu0 %v450
    %518 = vmatprep.subr.bf16.mxu0 0
    %519 = vmatpush1.bf16.msra.mxu0 %v453
    %520 = vmatprep.subr.bf16.mxu0 0
    %521 = vmatpush1.bf16.msra.mxu0 %v456
    %522 = vmatprep.subr.bf16.mxu0 0
    %523 = vmatpush1.bf16.msra.mxu0 %v459
    %524 = vmatprep.subr.bf16.mxu0 0
    %525 = vmatpush1.bf16.msra.mxu0 %v451
    %526 = vmatprep.subr.bf16.mxu0 0
    %527 = vmatpush1.bf16.msra.mxu0 %v454
    %528 = vmatprep.subr.bf16.mxu0 0
    %529 = vmatpush1.bf16.msra.mxu0 %v457
    %530 = vmatprep.subr.bf16.mxu0 0
    %531 = vmatpush1.bf16.msra.mxu0 %v460
    %532 = vmatprep.subr.bf16.mxu0 0
    %533 = vmatpush1.bf16.msra.mxu0 0
    %534 = vmatprep.subr.bf16.mxu0 0
    %535 = vmatpush1.bf16.msra.mxu0 0
    %536 = vmatprep.subr.bf16.mxu0 0
    %537 = vmatpush1.bf16.msra.mxu0 0
    %538 = vmatprep.subr.bf16.mxu0 0
    %539 = vmatpush1.bf16.msra.mxu0 0
    %540 = vmatprep.mubr.bf16.mxu0 %v493
    %541 = vmatmul.mubr.bf16.gmra.mrb[0].mxu0 %v492
    %v542 = vpop.f32.mrb[0].mxu0
    %v543 = vadd.f32 %v466, %v542
    %v544 = vpop.f32.mrb[0].mxu0
    %v545 = vpop.f32.mrb[0].mxu0
    %v546 = vadd.f32 %v466, %v545
    %v547 = vpop.f32.mrb[0].mxu0
    %548 = vmatprep.mubr.bf16.mxu0 %v495
    %549 = vmatmul.mubr.bf16.gmra.mrb[0].mxu0 %v494
    %v550 = vpop.f32.mrb[0].mxu0
    %v551 = vadd.f32 %v466, %v550
    %v552 = vpop.f32.mrb[0].mxu0
    %v553 = vpop.f32.mrb[0].mxu0
    %v554 = vadd.f32 %v466, %v553
    %v555 = vpop.f32.mrb[0].mxu0
    %556 = vmatprep.mubr.bf16.mxu0 %v497
    %557 = vmatmul.mubr.bf16.gmra.mrb[0].mxu0 %v496
    %v558 = vpop.f32.mrb[0].mxu0
    %v559 = vadd.f32 %v466, %v558
    %v560 = vpop.f32.mrb[0].mxu0
    %v561 = vpop.f32.mrb[0].mxu0
    %v562 = vadd.f32 %v466, %v561
    %v563 = vpop.f32.mrb[0].mxu0
    %564 = vmatprep.mubr.bf16.mxu0 %v499
    %565 = vmatmul.mubr.bf16.gmra.mrb[0].mxu0 %v498
    %v566 = vpop.f32.mrb[0].mxu0
    %v567 = vadd.f32 %v466, %v566
    %v568 = vpop.f32.mrb[0].mxu0
    %v569 = vpop.f32.mrb[0].mxu0
    %v570 = vadd.f32 %v466, %v569
    %v571 = vpop.f32.mrb[0].mxu0
    %572 = vdwg.mxu0
    %v573 = vmax.f32 %v543, 0.0
    %v574 = vmax.f32 %v546, 0.0
    %v575 = vmax.f32 %v551, 0.0
    %v576 = vmax.f32 %v554, 0.0
    %v577 = vmax.f32 %v559, 0.0
    %v578 = vmax.f32 %v562, 0.0
    %v579 = vmax.f32 %v567, 0.0
    %v580 = vmax.f32 %v570, 0.0
    %s581 = smul.u32 4, 16
    %s582 = smul.u32 %s581, 3
    %s583 = sshll.u32 %s582, 4
    %584 = dma.done [#allocation4], %s583
    %v585 = vpack.c.bf16 %v574, %v573
    %v586 = vpack.c.bf16 %v576, %v575
    %v587 = vpack.c.bf16 %v578, %v577
    %v588 = vpack.c.bf16 %v580, %v579
    %v589 = vld [vmem:[#allocation2] sm:$0xff]
    %v590 = vld [vmem:[#allocation2 + $0x8] sm:$0xff]
    %v591 = vld [vmem:[#allocation2 + $0x10] sm:$0xff]
    %v592 = vld [vmem:[#allocation2 + $0x18] sm:$0xff]
    %v593 = vld [vmem:[#allocation2 + $0x20] sm:$0xff]
    %v594 = vld [vmem:[#allocation2 + $0x28] sm:$0xff]
    %v595 = vld [vmem:[#allocation2 + $0x30] sm:$0xff]
    %v596 = vld [vmem:[#allocation2 + $0x38] sm:$0xff]
    %v597 = vld [vmem:[#allocation2 + $0x40] sm:$0xff]
    %v598 = vld [vmem:[#allocation2 + $0x48] sm:$0xff]
    %v599 = vld [vmem:[#allocation2 + $0x50] sm:$0xff]
    %v600 = vld [vmem:[#allocation2 + $0x58] sm:$0xff]
    %v601 = vld [vmem:[#allocation2 + $0x60] sm:$0xff]
    %v602 = vld [vmem:[#allocation2 + $0x68] sm:$0xff]
    %v603 = vld [vmem:[#allocation2 + $0x70] sm:$0xff]
    %v604 = vld [vmem:[#allocation2 + $0x78] sm:$0xff]
    %v605 = vld [vmem:[#allocation2 + $0x80] sm:$0xff]
    %v606 = vld [vmem:[#allocation2 + $0x88] sm:$0xff]
    %v607 = vld [vmem:[#allocation2 + $0x90] sm:$0xff]
    %v608 = vld [vmem:[#allocation2 + $0x98] sm:$0xff]
    %v609 = vld [vmem:[#allocation2 + $0xa0] sm:$0xff]
    %v610 = vld [vmem:[#allocation2 + $0xa8] sm:$0xff]
    %v611 = vld [vmem:[#allocation2 + $0xb0] sm:$0xff]
    %v612 = vld [vmem:[#allocation2 + $0xb8] sm:$0xff]
    %613 = vmatprep.subr.bf16.mxu0 %v590
    %614 = vmatpush1.bf16.msra.mxu0 %v589
    %615 = vmatprep.subr.bf16.mxu0 %v593
    %616 = vmatpush1.bf16.msra.mxu0 %v592
    %617 = vmatprep.subr.bf16.mxu0 %v596
    %618 = vmatpush1.bf16.msra.mxu0 %v595
    %619 = vmatprep.subr.bf16.mxu0 %v599
    %620 = vmatpush1.bf16.msra.mxu0 %v598
    %621 = vmatprep.subr.bf16.mxu0 %v602
    %622 = vmatpush1.bf16.msra.mxu0 %v601
    %623 = vmatprep.subr.bf16.mxu0 %v605
    %624 = vmatpush1.bf16.msra.mxu0 %v604
    %625 = vmatprep.subr.bf16.mxu0 %v608
    %626 = vmatpush1.bf16.msra.mxu0 %v607
    %627 = vmatprep.subr.bf16.mxu0 %v611
    %628 = vmatpush1.bf16.msra.mxu0 %v610
    %629 = vmatprep.subr.bf16.mxu0 0
    %630 = vmatpush1.bf16.msra.mxu0 0
    %631 = vmatprep.subr.bf16.mxu0 0
    %632 = vmatpush1.bf16.msra.mxu0 0
    %633 = vmatprep.subr.bf16.mxu0 0
    %634 = vmatpush1.bf16.msra.mxu0 0
    %635 = vmatprep.subr.bf16.mxu0 0
    %636 = vmatpush1.bf16.msra.mxu0 0
    %637 = vmatprep.subr.bf16.mxu0 0
    %638 = vmatpush1.bf16.msra.mxu0 0
    %639 = vmatprep.subr.bf16.mxu0 0
    %640 = vmatpush1.bf16.msra.mxu0 0
    %641 = vmatprep.subr.bf16.mxu0 0
    %642 = vmatpush1.bf16.msra.mxu0 0
    %643 = vmatprep.subr.bf16.mxu0 0
    %644 = vmatpush1.bf16.msra.mxu0 0
    %645 = vmatprep.mubr.bf16.mxu0 0
    %646 = vmatmul.mubr.bf16.gmra.mrb[0].mxu0 %v585
    %v647 = vpop.f32.mrb[0].mxu0
    %v648 = vadd.f32 0.0, %v647
    %v649 = vpop.f32.mrb[0].mxu0
    %v650 = vadd.f32 0.0, %v649
    %v651 = vpop.f32.mrb[0].mxu0
    %v652 = vadd.f32 0.0, %v651
    %v653 = vpop.f32.mrb[0].mxu0
    %v654 = vadd.f32 0.0, %v653
    %655 = vmatprep.mubr.bf16.mxu0 0
    %656 = vmatmul.mubr.bf16.gmra.mrb[0].mxu0 %v586
    %v657 = vpop.f32.mrb[0].mxu0
    %v658 = vadd.f32 0.0, %v657
    %v659 = vpop.f32.mrb[0].mxu0
    %v660 = vadd.f32 0.0, %v659
    %v661 = vpop.f32.mrb[0].mxu0
    %v662 = vadd.f32 0.0, %v661
    %v663 = vpop.f32.mrb[0].mxu0
    %v664 = vadd.f32 0.0, %v663
    %665 = vmatprep.mubr.bf16.mxu0 0
    %666 = vmatmul.mubr.bf16.gmra.mrb[0].mxu0 %v587
    %v667 = vpop.f32.mrb[0].mxu0
    %v668 = vadd.f32 0.0, %v667
    %v669 = vpop.f32.mrb[0].mxu0
    %v670 = vadd.f32 0.0, %v669
    %v671 = vpop.f32.mrb[0].mxu0
    %v672 = vadd.f32 0.0, %v671
    %v673 = vpop.f32.mrb[0].mxu0
    %v674 = vadd.f32 0.0, %v673
    %675 = vmatprep.mubr.bf16.mxu0 0
    %676 = vmatmul.mubr.bf16.gmra.mrb[0].mxu0 %v588
    %v677 = vpop.f32.mrb[0].mxu0
    %v678 = vadd.f32 0.0, %v677
    %v679 = vpop.f32.mrb[0].mxu0
    %v680 = vadd.f32 0.0, %v679
    %v681 = vpop.f32.mrb[0].mxu0
    %v682 = vadd.f32 0.0, %v681
    %v683 = vpop.f32.mrb[0].mxu0
    %v684 = vadd.f32 0.0, %v683
    %685 = vdwg.mxu0
    %686 = vmatprep.subr.bf16.mxu0 0
    %687 = vmatpush1.bf16.msra.mxu0 %v591
    %688 = vmatprep.subr.bf16.mxu0 0
    %689 = vmatpush1.bf16.msra.mxu0 %v594
    %690 = vmatprep.subr.bf16.mxu0 0
    %691 = vmatpush1.bf16.msra.mxu0 %v597
    %692 = vmatprep.subr.bf16.mxu0 0
    %693 = vmatpush1.bf16.msra.mxu0 %v600
    %694 = vmatprep.subr.bf16.mxu0 0
    %695 = vmatpush1.bf16.msra.mxu0 %v603
    %696 = vmatprep.subr.bf16.mxu0 0
    %697 = vmatpush1.bf16.msra.mxu0 %v606
    %698 = vmatprep.subr.bf16.mxu0 0
    %699 = vmatpush1.bf16.msra.mxu0 %v609
    %700 = vmatprep.subr.bf16.mxu0 0
    %701 = vmatpush1.bf16.msra.mxu0 %v612
    %702 = vmatprep.subr.bf16.mxu0 0
    %703 = vmatpush1.bf16.msra.mxu0 0
    %704 = vmatprep.subr.bf16.mxu0 0
    %705 = vmatpush1.bf16.msra.mxu0 0
    %706 = vmatprep.subr.bf16.mxu0 0
    %707 = vmatpush1.bf16.msra.mxu0 0
    %708 = vmatprep.subr.bf16.mxu0 0
    %709 = vmatpush1.bf16.msra.mxu0 0
    %710 = vmatprep.subr.bf16.mxu0 0
    %711 = vmatpush1.bf16.msra.mxu0 0
    %712 = vmatprep.subr.bf16.mxu0 0
    %713 = vmatpush1.bf16.msra.mxu0 0
    %714 = vmatprep.subr.bf16.mxu0 0
    %715 = vmatpush1.bf16.msra.mxu0 0
    %716 = vmatprep.subr.bf16.mxu0 0
    %717 = vmatpush1.bf16.msra.mxu0 0
    %718 = vmatprep.mubr.bf16.mxu0 0
    %719 = vmatmul.mubr.bf16.gmra.mrb[0].mxu0 %v585
    %v720 = vpop.f32.mrb[0].mxu0
    %v721 = vadd.f32 0.0, %v720
    %v722 = vpop.f32.mrb[0].mxu0
    %v723 = vpop.f32.mrb[0].mxu0
    %v724 = vadd.f32 0.0, %v723
    %v725 = vpop.f32.mrb[0].mxu0
    %726 = vmatprep.mubr.bf16.mxu0 0
    %727 = vmatmul.mubr.bf16.gmra.mrb[0].mxu0 %v586
    %v728 = vpop.f32.mrb[0].mxu0
    %v729 = vadd.f32 0.0, %v728
    %v730 = vpop.f32.mrb[0].mxu0
    %v731 = vpop.f32.mrb[0].mxu0
    %v732 = vadd.f32 0.0, %v731
    %v733 = vpop.f32.mrb[0].mxu0
    %734 = vmatprep.mubr.bf16.mxu0 0
    %735 = vmatmul.mubr.bf16.gmra.mrb[0].mxu0 %v587
    %v736 = vpop.f32.mrb[0].mxu0
    %v737 = vadd.f32 0.0, %v736
    %v738 = vpop.f32.mrb[0].mxu0
    %v739 = vpop.f32.mrb[0].mxu0
    %v740 = vadd.f32 0.0, %v739
    %v741 = vpop.f32.mrb[0].mxu0
    %742 = vmatprep.mubr.bf16.mxu0 0
    %743 = vmatmul.mubr.bf16.gmra.mrb[0].mxu0 %v588
    %v744 = vpop.f32.mrb[0].mxu0
    %v745 = vadd.f32 0.0, %v744
    %v746 = vpop.f32.mrb[0].mxu0
    %v747 = vpop.f32.mrb[0].mxu0
    %v748 = vadd.f32 0.0, %v747
    %v749 = vpop.f32.mrb[0].mxu0
    %750 = vdwg.mxu0
    %v751 = vpack.c.bf16 %v652, %v648
    %v752 = vpack.c.bf16 %v654, %v650
    %v753 = vpack.c.bf16 %v724, %v721
    %v754 = vpack.c.bf16 %v662, %v658
    %v755 = vpack.c.bf16 %v664, %v660
    %v756 = vpack.c.bf16 %v732, %v729
    %v757 = vpack.c.bf16 %v672, %v668
    %v758 = vpack.c.bf16 %v674, %v670
    %v759 = vpack.c.bf16 %v740, %v737
    %v760 = vpack.c.bf16 %v682, %v678
    %v761 = vpack.c.bf16 %v684, %v680
    %v762 = vpack.c.bf16 %v748, %v745
    %v763 = vld [vmem:[%s6] sm:$0x1]
    %v765 = vlaneseq
    %v766 = vshrl.u32 %v765, 7
    %v767 = vsub.s32 0, %v766
    %v768 = vrot.slane %v763, %v767
    %770 = vmatprep.subr.bf16.mxu0 0
    %771 = vmatpush1.bf16.msra.mxu0 %v751
    %772 = vmatprep.subr.bf16.mxu0 0
    %773 = vmatpush1.bf16.msra.mxu0 %v754
    %774 = vmatprep.subr.bf16.mxu0 0
    %775 = vmatpush1.bf16.msra.mxu0 %v757
    %776 = vmatprep.subr.bf16.mxu0 0
    %777 = vmatpush1.bf16.msra.mxu0 %v760
    %778 = vmatprep.subr.bf16.mxu0 0
    %779 = vmatpush1.bf16.msra.mxu0 %v752
    %780 = vmatprep.subr.bf16.mxu0 0
    %781 = vmatpush1.bf16.msra.mxu0 %v755
    %782 = vmatprep.subr.bf16.mxu0 0
    %783 = vmatpush1.bf16.msra.mxu0 %v758
    %784 = vmatprep.subr.bf16.mxu0 0
    %785 = vmatpush1.bf16.msra.mxu0 %v761
    %786 = vmatprep.subr.bf16.mxu0 0
    %787 = vmatpush1.bf16.msra.mxu0 %v753
    %788 = vmatprep.subr.bf16.mxu0 0
    %789 = vmatpush1.bf16.msra.mxu0 %v756
    %790 = vmatprep.subr.bf16.mxu0 0
    %791 = vmatpush1.bf16.msra.mxu0 %v759
    %792 = vmatprep.subr.bf16.mxu0 0
    %793 = vmatpush1.bf16.msra.mxu0 %v762
    %794 = vmatprep.subr.bf16.mxu0 0
    %795 = vmatpush1.bf16.msra.mxu0 0
    %796 = vmatprep.subr.bf16.mxu0 0
    %797 = vmatpush1.bf16.msra.mxu0 0
    %798 = vmatprep.subr.bf16.mxu0 0
    %799 = vmatpush1.bf16.msra.mxu0 0
    %800 = vmatprep.subr.bf16.mxu0 0
    %801 = vmatpush1.bf16.msra.mxu0 0
    %802 = vmatprep.mubr.bf16.mxu0 %v493
    %803 = vmatmul.mubr.bf16.gmra.mrb[0].mxu0 %v492
    %v804 = vpop.f32.mrb[0].mxu0
    %v805 = vadd.f32 %v768, %v804
    %v806 = vpop.f32.mrb[0].mxu0
    %v807 = vpop.f32.mrb[0].mxu0
    %v808 = vadd.f32 %v768, %v807
    %v809 = vpop.f32.mrb[0].mxu0
    %810 = vmatprep.mubr.bf16.mxu0 %v495
    %811 = vmatmul.mubr.bf16.gmra.mrb[0].mxu0 %v494
    %v812 = vpop.f32.mrb[0].mxu0
    %v813 = vadd.f32 %v768, %v812
    %v814 = vpop.f32.mrb[0].mxu0
    %v815 = vpop.f32.mrb[0].mxu0
    %v816 = vadd.f32 %v768, %v815
    %v817 = vpop.f32.mrb[0].mxu0
    %818 = vmatprep.mubr.bf16.mxu0 %v497
    %819 = vmatmul.mubr.bf16.gmra.mrb[0].mxu0 %v496
    %v820 = vpop.f32.mrb[0].mxu0
    %v821 = vadd.f32 %v768, %v820
    %v822 = vpop.f32.mrb[0].mxu0
    %v823 = vpop.f32.mrb[0].mxu0
    %v824 = vadd.f32 %v768, %v823
    %v825 = vpop.f32.mrb[0].mxu0
    %826 = vmatprep.mubr.bf16.mxu0 %v499
    %827 = vmatmul.mubr.bf16.gmra.mrb[0].mxu0 %v498
    %v828 = vpop.f32.mrb[0].mxu0
    %v829 = vadd.f32 %v768, %v828
    %v830 = vpop.f32.mrb[0].mxu0
    %v831 = vpop.f32.mrb[0].mxu0
    %v832 = vadd.f32 %v768, %v831
    %v833 = vpop.f32.mrb[0].mxu0
    %834 = vdwg.mxu0
    %v835 = vmax.f32 %v805, 0.0
    %v836 = vmax.f32 %v808, 0.0
    %v837 = vmax.f32 %v813, 0.0
    %v838 = vmax.f32 %v816, 0.0
    %v839 = vmax.f32 %v821, 0.0
    %v840 = vmax.f32 %v824, 0.0
    %v841 = vmax.f32 %v829, 0.0
    %v842 = vmax.f32 %v832, 0.0
    %s843 = sshll.u32 %s582, 4
    %844 = dma.done %s76, %s843
    %v845 = vpack.c.bf16 %v836, %v835
    %v846 = vpack.c.bf16 %v838, %v837
    %v847 = vpack.c.bf16 %v840, %v839
    %v848 = vpack.c.bf16 %v842, %v841
    %v849 = vld [vmem:[#allocation3] sm:$0xff]
    %v850 = vld [vmem:[#allocation3 + $0x8] sm:$0xff]
    %v851 = vld [vmem:[#allocation3 + $0x10] sm:$0xff]
    %v852 = vld [vmem:[#allocation3 + $0x18] sm:$0xff]
    %v853 = vld [vmem:[#allocation3 + $0x20] sm:$0xff]
    %v854 = vld [vmem:[#allocation3 + $0x28] sm:$0xff]
    %v855 = vld [vmem:[#allocation3 + $0x30] sm:$0xff]
    %v856 = vld [vmem:[#allocation3 + $0x38] sm:$0xff]
    %v857 = vld [vmem:[#allocation3 + $0x40] sm:$0xff]
    %v858 = vld [vmem:[#allocation3 + $0x48] sm:$0xff]
    %v859 = vld [vmem:[#allocation3 + $0x50] sm:$0xff]
    %v860 = vld [vmem:[#allocation3 + $0x58] sm:$0xff]
    %v861 = vld [vmem:[#allocation3 + $0x60] sm:$0xff]
    %v862 = vld [vmem:[#allocation3 + $0x68] sm:$0xff]
    %v863 = vld [vmem:[#allocation3 + $0x70] sm:$0xff]
    %v864 = vld [vmem:[#allocation3 + $0x78] sm:$0xff]
    %v865 = vld [vmem:[#allocation3 + $0x80] sm:$0xff]
    %v866 = vld [vmem:[#allocation3 + $0x88] sm:$0xff]
    %v867 = vld [vmem:[#allocation3 + $0x90] sm:$0xff]
    %v868 = vld [vmem:[#allocation3 + $0x98] sm:$0xff]
    %v869 = vld [vmem:[#allocation3 + $0xa0] sm:$0xff]
    %v870 = vld [vmem:[#allocation3 + $0xa8] sm:$0xff]
    %v871 = vld [vmem:[#allocation3 + $0xb0] sm:$0xff]
    %v872 = vld [vmem:[#allocation3 + $0xb8] sm:$0xff]
    %873 = vmatprep.subr.bf16.mxu0 %v850
    %874 = vmatpush1.bf16.msra.mxu0 %v849
    %875 = vmatprep.subr.bf16.mxu0 %v853
    %876 = vmatpush1.bf16.msra.mxu0 %v852
    %877 = vmatprep.subr.bf16.mxu0 %v856
    %878 = vmatpush1.bf16.msra.mxu0 %v855
    %879 = vmatprep.subr.bf16.mxu0 %v859
    %880 = vmatpush1.bf16.msra.mxu0 %v858
    %881 = vmatprep.subr.bf16.mxu0 %v862
    %882 = vmatpush1.bf16.msra.mxu0 %v861
    %883 = vmatprep.subr.bf16.mxu0 %v865
    %884 = vmatpush1.bf16.msra.mxu0 %v864
    %885 = vmatprep.subr.bf16.mxu0 %v868
    %886 = vmatpush1.bf16.msra.mxu0 %v867
    %887 = vmatprep.subr.bf16.mxu0 %v871
    %888 = vmatpush1.bf16.msra.mxu0 %v870
    %889 = vmatprep.subr.bf16.mxu0 0
    %890 = vmatpush1.bf16.msra.mxu0 0
    %891 = vmatprep.subr.bf16.mxu0 0
    %892 = vmatpush1.bf16.msra.mxu0 0
    %893 = vmatprep.subr.bf16.mxu0 0
    %894 = vmatpush1.bf16.msra.mxu0 0
    %895 = vmatprep.subr.bf16.mxu0 0
    %896 = vmatpush1.bf16.msra.mxu0 0
    %897 = vmatprep.subr.bf16.mxu0 0
    %898 = vmatpush1.bf16.msra.mxu0 0
    %899 = vmatprep.subr.bf16.mxu0 0
    %900 = vmatpush1.bf16.msra.mxu0 0
    %901 = vmatprep.subr.bf16.mxu0 0
    %902 = vmatpush1.bf16.msra.mxu0 0
    %903 = vmatprep.subr.bf16.mxu0 0
    %904 = vmatpush1.bf16.msra.mxu0 0
    %905 = vmatprep.mubr.bf16.mxu0 0
    %906 = vmatmul.mubr.bf16.gmra.mrb[0].mxu0 %v845
    %v907 = vpop.f32.mrb[0].mxu0
    %v908 = vadd.f32 0.0, %v907
    %v909 = vpop.f32.mrb[0].mxu0
    %v910 = vadd.f32 0.0, %v909
    %v911 = vpop.f32.mrb[0].mxu0
    %v912 = vadd.f32 0.0, %v911
    %v913 = vpop.f32.mrb[0].mxu0
    %v914 = vadd.f32 0.0, %v913
    %915 = vmatprep.mubr.bf16.mxu0 0
    %916 = vmatmul.mubr.bf16.gmra.mrb[0].mxu0 %v846
    %v917 = vpop.f32.mrb[0].mxu0
    %v918 = vadd.f32 0.0, %v917
    %v919 = vpop.f32.mrb[0].mxu0
    %v920 = vadd.f32 0.0, %v919
    %v921 = vpop.f32.mrb[0].mxu0
    %v922 = vadd.f32 0.0, %v921
    %v923 = vpop.f32.mrb[0].mxu0
    %v924 = vadd.f32 0.0, %v923
    %925 = vmatprep.mubr.bf16.mxu0 0
    %926 = vmatmul.mubr.bf16.gmra.mrb[0].mxu0 %v847
    %v927 = vpop.f32.mrb[0].mxu0
    %v928 = vadd.f32 0.0, %v927
    %v929 = vpop.f32.mrb[0].mxu0
    %v930 = vadd.f32 0.0, %v929
    %v931 = vpop.f32.mrb[0].mxu0
    %v932 = vadd.f32 0.0, %v931
    %v933 = vpop.f32.mrb[0].mxu0
    %v934 = vadd.f32 0.0, %v933
    %935 = vmatprep.mubr.bf16.mxu0 0
    %936 = vmatmul.mubr.bf16.gmra.mrb[0].mxu0 %v848
    %v937 = vpop.f32.mrb[0].mxu0
    %v938 = vadd.f32 0.0, %v937
    %v939 = vpop.f32.mrb[0].mxu0
    %v940 = vadd.f32 0.0, %v939
    %v941 = vpop.f32.mrb[0].mxu0
    %v942 = vadd.f32 0.0, %v941
    %v943 = vpop.f32.mrb[0].mxu0
    %v944 = vadd.f32 0.0, %v943
    %945 = vdwg.mxu0
    %946 = vmatprep.subr.bf16.mxu0 0
    %947 = vmatpush1.bf16.msra.mxu0 %v851
    %948 = vmatprep.subr.bf16.mxu0 0
    %949 = vmatpush1.bf16.msra.mxu0 %v854
    %950 = vmatprep.subr.bf16.mxu0 0
    %951 = vmatpush1.bf16.msra.mxu0 %v857
    %952 = vmatprep.subr.bf16.mxu0 0
    %953 = vmatpush1.bf16.msra.mxu0 %v860
    %954 = vmatprep.subr.bf16.mxu0 0
    %955 = vmatpush1.bf16.msra.mxu0 %v863
    %956 = vmatprep.subr.bf16.mxu0 0
    %957 = vmatpush1.bf16.msra.mxu0 %v866
    %958 = vmatprep.subr.bf16.mxu0 0
    %959 = vmatpush1.bf16.msra.mxu0 %v869
    %960 = vmatprep.subr.bf16.mxu0 0
    %961 = vmatpush1.bf16.msra.mxu0 %v872
    %962 = vmatprep.subr.bf16.mxu0 0
    %963 = vmatpush1.bf16.msra.mxu0 0
    %964 = vmatprep.subr.bf16.mxu0 0
    %965 = vmatpush1.bf16.msra.mxu0 0
    %966 = vmatprep.subr.bf16.mxu0 0
    %967 = vmatpush1.bf16.msra.mxu0 0
    %968 = vmatprep.subr.bf16.mxu0 0
    %969 = vmatpush1.bf16.msra.mxu0 0
    %970 = vmatprep.subr.bf16.mxu0 0
    %971 = vmatpush1.bf16.msra.mxu0 0
    %972 = vmatprep.subr.bf16.mxu0 0
    %973 = vmatpush1.bf16.msra.mxu0 0
    %974 = vmatprep.subr.bf16.mxu0 0
    %975 = vmatpush1.bf16.msra.mxu0 0
    %976 = vmatprep.subr.bf16.mxu0 0
    %977 = vmatpush1.bf16.msra.mxu0 0
    %978 = vmatprep.mubr.bf16.mxu0 0
    %979 = vmatmul.mubr.bf16.gmra.mrb[0].mxu0 %v845
    %v980 = vpop.f32.mrb[0].mxu0
    %v981 = vadd.f32 0.0, %v980
    %v982 = vpop.f32.mrb[0].mxu0
    %v983 = vpop.f32.mrb[0].mxu0
    %v984 = vadd.f32 0.0, %v983
    %v985 = vpop.f32.mrb[0].mxu0
    %986 = vmatprep.mubr.bf16.mxu0 0
    %987 = vmatmul.mubr.bf16.gmra.mrb[0].mxu0 %v846
    %v988 = vpop.f32.mrb[0].mxu0
    %v989 = vadd.f32 0.0, %v988
    %v990 = vpop.f32.mrb[0].mxu0
    %v991 = vpop.f32.mrb[0].mxu0
    %v992 = vadd.f32 0.0, %v991
    %v993 = vpop.f32.mrb[0].mxu0
    %994 = vmatprep.mubr.bf16.mxu0 0
    %995 = vmatmul.mubr.bf16.gmra.mrb[0].mxu0 %v847
    %v996 = vpop.f32.mrb[0].mxu0
    %v997 = vadd.f32 0.0, %v996
    %v998 = vpop.f32.mrb[0].mxu0
    %v999 = vpop.f32.mrb[0].mxu0
    %v1000 = vadd.f32 0.0, %v999
    %v1001 = vpop.f32.mrb[0].mxu0
    %1002 = vmatprep.mubr.bf16.mxu0 0
    %1003 = vmatmul.mubr.bf16.gmra.mrb[0].mxu0 %v848
    %v1004 = vpop.f32.mrb[0].mxu0
    %v1005 = vadd.f32 0.0, %v1004
    %v1006 = vpop.f32.mrb[0].mxu0
    %v1007 = vpop.f32.mrb[0].mxu0
    %v1008 = vadd.f32 0.0, %v1007
    %v1009 = vpop.f32.mrb[0].mxu0
    %1010 = vdwg.mxu0
    %v1011 = vpack.c.bf16 %v912, %v908
    %v1012 = vpack.c.bf16 %v914, %v910
    %v1013 = vpack.c.bf16 %v984, %v981
    %v1014 = vpack.c.bf16 %v922, %v918
    %v1015 = vpack.c.bf16 %v924, %v920
    %v1016 = vpack.c.bf16 %v992, %v989
    %v1017 = vpack.c.bf16 %v932, %v928
    %v1018 = vpack.c.bf16 %v934, %v930
    %v1019 = vpack.c.bf16 %v1000, %v997
    %v1020 = vpack.c.bf16 %v942, %v938
    %v1021 = vpack.c.bf16 %v944, %v940
    %v1022 = vpack.c.bf16 %v1008, %v1005
    %v1023 = vld [vmem:[%s7] sm:$0x1]
    %v1025 = vlaneseq
    %v1026 = vshrl.u32 %v1025, 7
    %v1027 = vsub.s32 0, %v1026
    %v1028 = vrot.slane %v1023, %v1027
    %1030 = vmatprep.subr.bf16.mxu0 0
    %1031 = vmatpush1.bf16.msra.mxu0 %v1011
    %1032 = vmatprep.subr.bf16.mxu0 0
    %1033 = vmatpush1.bf16.msra.mxu0 %v1014
    %1034 = vmatprep.subr.bf16.mxu0 0
    %1035 = vmatpush1.bf16.msra.mxu0 %v1017
    %1036 = vmatprep.subr.bf16.mxu0 0
    %1037 = vmatpush1.bf16.msra.mxu0 %v1020
    %1038 = vmatprep.subr.bf16.mxu0 0
    %1039 = vmatpush1.bf16.msra.mxu0 %v1012
    %1040 = vmatprep.subr.bf16.mxu0 0
    %1041 = vmatpush1.bf16.msra.mxu0 %v1015
    %1042 = vmatprep.subr.bf16.mxu0 0
    %1043 = vmatpush1.bf16.msra.mxu0 %v1018
    %1044 = vmatprep.subr.bf16.mxu0 0
    %1045 = vmatpush1.bf16.msra.mxu0 %v1021
    %1046 = vmatprep.subr.bf16.mxu0 0
    %1047 = vmatpush1.bf16.msra.mxu0 %v1013
    %1048 = vmatprep.subr.bf16.mxu0 0
    %1049 = vmatpush1.bf16.msra.mxu0 %v1016
    %1050 = vmatprep.subr.bf16.mxu0 0
    %1051 = vmatpush1.bf16.msra.mxu0 %v1019
    %1052 = vmatprep.subr.bf16.mxu0 0
    %1053 = vmatpush1.bf16.msra.mxu0 %v1022
    %1054 = vmatprep.subr.bf16.mxu0 0
    %1055 = vmatpush1.bf16.msra.mxu0 0
    %1056 = vmatprep.subr.bf16.mxu0 0
    %1057 = vmatpush1.bf16.msra.mxu0 0
    %1058 = vmatprep.subr.bf16.mxu0 0
    %1059 = vmatpush1.bf16.msra.mxu0 0
    %1060 = vmatprep.subr.bf16.mxu0 0
    %1061 = vmatpush1.bf16.msra.mxu0 0
    %1062 = vmatprep.mubr.bf16.mxu0 %v493
    %1063 = vmatmul.mubr.bf16.gmra.mrb[0].mxu0 %v492
    %v1064 = vpop.f32.mrb[0].mxu0
    %v1065 = vadd.f32 %v1028, %v1064
    %v1066 = vpop.f32.mrb[0].mxu0
    %v1067 = vpop.f32.mrb[0].mxu0
    %v1068 = vadd.f32 %v1028, %v1067
    %v1069 = vpop.f32.mrb[0].mxu0
    %1070 = vmatprep.mubr.bf16.mxu0 %v495
    %1071 = vmatmul.mubr.bf16.gmra.mrb[0].mxu0 %v494
    %v1072 = vpop.f32.mrb[0].mxu0
    %v1073 = vadd.f32 %v1028, %v1072
    %v1074 = vpop.f32.mrb[0].mxu0
    %v1075 = vpop.f32.mrb[0].mxu0
    %v1076 = vadd.f32 %v1028, %v1075
    %v1077 = vpop.f32.mrb[0].mxu0
    %1078 = vmatprep.mubr.bf16.mxu0 %v497
    %1079 = vmatmul.mubr.bf16.gmra.mrb[0].mxu0 %v496
    %v1080 = vpop.f32.mrb[0].mxu0
    %v1081 = vadd.f32 %v1028, %v1080
    %v1082 = vpop.f32.mrb[0].mxu0
    %v1083 = vpop.f32.mrb[0].mxu0
    %v1084 = vadd.f32 %v1028, %v1083
    %v1085 = vpop.f32.mrb[0].mxu0
    %1086 = vmatprep.mubr.bf16.mxu0 %v499
    %1087 = vmatmul.mubr.bf16.gmra.mrb[0].mxu0 %v498
    %v1088 = vpop.f32.mrb[0].mxu0
    %v1089 = vadd.f32 %v1028, %v1088
    %v1090 = vpop.f32.mrb[0].mxu0
    %v1091 = vpop.f32.mrb[0].mxu0
    %v1092 = vadd.f32 %v1028, %v1091
    %v1093 = vpop.f32.mrb[0].mxu0
    %1094 = vdwg.mxu0
    %1095 = vst [vmem:[#allocation8] sm:$0xff] %v1065
    %1096 = vst [vmem:[#allocation8 + $0x8] sm:$0xff] %v1068
    %1097 = vst [vmem:[#allocation8 + $0x10] sm:$0xff] %v1073
    %1098 = vst [vmem:[#allocation8 + $0x18] sm:$0xff] %v1076
    %1099 = vst [vmem:[#allocation8 + $0x20] sm:$0xff] %v1081
    %1100 = vst [vmem:[#allocation8 + $0x28] sm:$0xff] %v1084
    %1101 = vst [vmem:[#allocation8 + $0x30] sm:$0xff] %v1089
    %1102 = vst [vmem:[#allocation8 + $0x38] sm:$0xff] %v1092
    // Predicated region
    $region30: #{_forward_padded.1} parent=1 // pred_check
      _
    $region31: #{_forward_padded.1} parent=1 // pred_check_branch
      %1104 = sbr.rel (0) target = $region33
    $region32: #{_forward_padded.1} parent=1 // pred_region
      %s1106 = ssub.s32 1024, 1024
      %1107 = vsyncadd [#allocation7], %s1106
      %s1108 = sshll.u32 [#allocation8], 4
      %s1109 = int_to_ptr.vmem [resolvable:$true] %s1108
      %1114 = dma.vmem_to_hbm [thread:$0]  %s1109, 1024, %s8, [#allocation7], 128, 128, 8
    $region33: #{_forward_padded.1} parent=1 // pred_fallthru
      _
    // Predicated region
    $region34: #{_forward_padded.1} parent=1 // pred_check
      _
    $region35: #{_forward_padded.1} parent=1 // pred_check_branch
      %1116 = sbr.rel (0) target = $region37
    $region36: #{_forward_padded.1} parent=1 // pred_region
      %1117 = dma.done [#allocation7], 1024
    $region37: #{_forward_padded.1} parent=1 // pred_fallthru
      _
    %1118 = vsyncpa [#allocation6], 1
    %1119 = vsyncpa [#allocation7], 1
  %1120 = vsyncmov [#allocation4]
  %s1121 = vpop.sfrf %1120
  %p1122 = scmp.eq.s32.totalorder %s1121, 0
  %p1123 = pneg %p1122
  %1125 = shalt.err (%p1123)
  %s1126 = scalar_lea.sflag [#allocation4], 1
  %1127 = vsyncmov %s1126
  %s1128 = vpop.sfrf %1127
  %p1129 = scmp.eq.s32.totalorder %s1128, 0
  %p1130 = pneg %p1129
  %1132 = shalt.err (%p1130)

</llo_original>
